<compile_context>
chip_gen: v6e
topology: v6e:2x2x1
jax: 0.10.0
libtpu: 0.0.40
codegen_flags: <defaults>
</compile_context>

<pallas_src>
import functools

import jax
import jax.numpy as jnp
from jax import lax
from jax.experimental import pallas as pl
from jax.experimental.pallas import tpu as pltpu

NEG_SLOPE = 0.01  # nn.LeakyReLU default


def _leaky(x):
    return jnp.where(x >= 0, x, NEG_SLOPE * x)


def _band_weight_3x3(k_hwio, W):
    """(3,3,Ci,Co) HWIO -> (3*W*Ci, W*Co) block-banded weight.

    lhs column dy*(W*Ci) + w'*Ci + ci multiplies output column w*Co + co with
    k[dy, w'-w+1, ci, co] (zero outside the 3-wide band): the dx taps and the
    conv's left/right zero padding are encoded in the weight itself.
    """
    _, _, Ci, Co = k_hwio.shape
    blocks = []
    for dy in range(3):
        blk = jnp.zeros((W, Ci, W, Co), jnp.float32)
        for dx in range(3):
            sel = jnp.eye(W, k=1 - dx, dtype=jnp.float32)   # sel[w', w]=1 iff w'=w+dx-1
            blk = blk + sel[:, None, :, None] * k_hwio[dy, dx][None, :, None, :]
        blocks.append(blk.reshape(W * Ci, W * Co))
    return jnp.concatenate(blocks, axis=0)


def _blockdiag_1x1(w11, W):
    """(Ci,Co) -> (W*Ci, W*Co) block-diagonal weight for the 1x1 conv."""
    eye = jnp.eye(W, dtype=jnp.float32)
    return (eye[:, None, :, None] * w11[None, :, None, :]).reshape(
        W * w11.shape[0], W * w11.shape[1])


@functools.partial(jax.jit, static_argnames=("compute_dtype",))
def conv_block_forward(x_nhwc, params, compute_dtype=jnp.bfloat16):
    """Fused ConvBlock forward.  x_nhwc: (N,H,W,Cin) f32 -> (N,H,W,Cout) f32."""
    N, H, W, Cin = x_nhwc.shape
    w1, b1 = params["w1"], params["b1"]      # (3,3,Cin,Cout),  (Cout,)
    w2, b2 = params["w2"], params["b2"]      # (3,3,Cout,Cout), (Cout,)
    w11, b11 = params["w11"], params["b11"]  # (Cin,Cout),      (Cout,)
    Cout = w1.shape[-1]
    cdt = jnp.dtype(compute_dtype)
    WCi, WCo = W * Cin, W * Cout

    # ---- host-side packing: block-banded conv weights, fused conv2+1x1
    #      weight, per-pixel-tiled lane-dense biases. ----
    wA = _band_weight_3x3(w1, W).astype(cdt)                       # (3*WCi, WCo)
    w2b = _band_weight_3x3(w2, W)                                  # (3*WCo, WCo)
    wres = _blockdiag_1x1(w11, W)                                  # (WCi,  WCo)
    wB = jnp.concatenate(
        [jnp.concatenate([w2b, jnp.zeros((3 * WCo, WCo), jnp.float32)], axis=1),
         jnp.concatenate([jnp.zeros((WCi, WCo), jnp.float32), wres], axis=1)],
        axis=0).astype(cdt)                                        # (3*WCo+WCi, 2*WCo)
    bA = jnp.tile(b1, (W,)).reshape(1, WCo).astype(jnp.float32)
    bB = jnp.concatenate([jnp.tile(b2, (W,)),
                          jnp.tile(b11, (W,))]).reshape(1, 2 * WCo).astype(jnp.float32)

    # Lane-dense input, cast once on the host (halves the HBM read in bf16).
    x_flat = x_nhwc.reshape(N, H, WCi).astype(cdt)

    def kernel(x_ref, wA_ref, bA_ref, wB_ref, bB_ref, o_ref, xp, hp):
        x2d = x_ref[0]                                             # (H, W*Cin)

        # Row-padded copy of x: zero only the two 1-row halos, write interior.
        xp[0:1, :] = jnp.zeros((1, WCi), cdt)
        xp[H + 1:H + 2, :] = jnp.zeros((1, WCi), cdt)
        xp[1:H + 1, :] = x2d

        # Conv1 + bias + LeakyReLU: ONE MXU dot.  dy taps = 3 row windows,
        # dx taps live inside the block-banded weight.
        lhs1 = jnp.concatenate(
            [xp[0:H, :], xp[1:H + 1, :], xp[2:H + 2, :]], axis=1)  # (H, 3*W*Cin)
        h = _leaky(jnp.dot(lhs1, wA_ref[...],
                           preferred_element_type=jnp.float32) + bA_ref[...])

        # Row-padded copy of the hidden activation (stays in VMEM, lane-dense).
        hp[0:1, :] = jnp.zeros((1, WCo), cdt)
        hp[H + 1:H + 2, :] = jnp.zeros((1, WCo), cdt)
        hp[1:H + 1, :] = h.astype(cdt)

        # Conv2 fused with the 1x1 residual: ONE MXU dot against the
        # block-diagonal combined weight, then a lane-dense f32 epilogue.
        lhs2 = jnp.concatenate(
            [hp[0:H, :], hp[1:H + 1, :], hp[2:H + 2, :], x2d], axis=1)
        acc = jnp.dot(lhs2, wB_ref[...],
                      preferred_element_type=jnp.float32) + bB_ref[...]  # (H, 2*WCo)
        out = _leaky(acc[:, :WCo]) + acc[:, WCo:]
        o_ref[0] = out.astype(o_ref.dtype)                         # (H, W*Cout) store

    # VMEM footprint estimate (double-buffered blocks + scratch + temporaries).
    cb = cdt.itemsize
    est = (2 * H * WCi * cb + 2 * H * WCo * 4                      # x / out blocks
           + 2 * (wA.size + wB.size) * cb + 2 * (bA.size + bB.size) * 4
           + (H + 2) * (WCi + WCo) * cb                            # row-padded scratches
           + H * (3 * WCi + 4 * WCo + WCi) * cb                    # lhs1 / lhs2
           + H * (WCo + 2 * WCo) * 4 * 2)                          # f32 h / acc / out
    try:
        phys = pltpu.get_tpu_info().vmem_capacity_bytes            # 64MiB v7x, 128MiB v5e/v6e
    except Exception:
        phys = 64 * 1024 * 1024
    vmem_limit = int(min(max(2 * est, 16 * 1024 * 1024), phys * 7 // 8))

    out_flat = pl.pallas_call(
        kernel,
        out_shape=jax.ShapeDtypeStruct((N, H, WCo), jnp.float32),
        grid_spec=pltpu.PrefetchScalarGridSpec(
            num_scalar_prefetch=0,
            grid=(N,),
            in_specs=[
                pl.BlockSpec((1, H, WCi), lambda n: (n, 0, 0)),
                pl.BlockSpec((3 * WCi, WCo), lambda n: (0, 0)),
                pl.BlockSpec((1, WCo), lambda n: (0, 0)),
                pl.BlockSpec((3 * WCo + WCi, 2 * WCo), lambda n: (0, 0)),
                pl.BlockSpec((1, 2 * WCo), lambda n: (0, 0)),
            ],
            out_specs=pl.BlockSpec((1, H, WCo), lambda n: (n, 0, 0)),
            scratch_shapes=[
                pltpu.VMEM((H + 2, WCi), cdt),   # row-padded input
                pltpu.VMEM((H + 2, WCo), cdt),   # row-padded hidden activation
            ],
        ),
        compiler_params=pltpu.CompilerParams(
            dimension_semantics=("parallel",),   # no cross-step state -> safe on megacore
            vmem_limit_bytes=vmem_limit),
    )(x_flat, wA, bA, wB, bB)

    return out_flat.reshape(N, H, W, Cout)


def reference_forward(x_nhwc, params):
    """Pure-JAX f32 reference using lax.conv_general_dilated (NHWC / HWIO)."""
    dn = ("NHWC", "HWIO", "NHWC")
    h = lax.conv_general_dilated(x_nhwc, params["w1"], (1, 1), "SAME",
                                 dimension_numbers=dn) + params["b1"]
    h = _leaky(h)
    h = lax.conv_general_dilated(h, params["w2"], (1, 1), "SAME",
                                 dimension_numbers=dn) + params["b2"]
    out1 = _leaky(h)
    w11_4d = params["w11"][None, None]  # (1,1,Cin,Cout)
    out2 = lax.conv_general_dilated(x_nhwc, w11_4d, (1, 1), "SAME",
                                    dimension_numbers=dn) + params["b11"]
    return out1 + out2


def init_params(key, in_channel, out_channel):
    k1, k2, k3, k4, k5, k6 = jax.random.split(key, 6)
    s1 = 1.0 / jnp.sqrt(in_channel * 9.0)
    s2 = 1.0 / jnp.sqrt(out_channel * 9.0)
    s3 = 1.0 / jnp.sqrt(float(in_channel))
    return {
        "w1": jax.random.uniform(k1, (3, 3, in_channel, out_channel),
                                 jnp.float32, -s1, s1),
        "b1": jax.random.uniform(k2, (out_channel,), jnp.float32, -s1, s1),
        "w2": jax.random.uniform(k3, (3, 3, out_channel, out_channel),
                                 jnp.float32, -s2, s2),
        "b2": jax.random.uniform(k4, (out_channel,), jnp.float32, -s2, s2),
        "w11": jax.random.uniform(k5, (in_channel, out_channel),
                                  jnp.float32, -s3, s3),
        "b11": jax.random.uniform(k6, (out_channel,), jnp.float32, -s3, s3),
    }


if __name__ == "__main__":
    key = jax.random.PRNGKey(0)
    kx, kp = jax.random.split(key)

    N, Cin, Cout, H, W = 2, 4, 8, 16, 16
    # Input follows the PyTorch NCHW convention; transpose to NHWC for the kernel.
    x_nchw = jax.random.normal(kx, (N, Cin, H, W), jnp.float32)
    x_nhwc = jnp.transpose(x_nchw, (0, 2, 3, 1))

    params = init_params(kp, Cin, Cout)
    ref = jax.block_until_ready(reference_forward(x_nhwc, params))

    # f32 compute path: matches the PyTorch float32 semantics tightly.
    out_f32 = jax.block_until_ready(
        conv_block_forward(x_nhwc, params, compute_dtype=jnp.float32))
    assert out_f32.shape == (N, H, W, Cout)
    assert jnp.allclose(out_f32, ref, atol=1e-4, rtol=1e-4), (
        float(jnp.max(jnp.abs(out_f32 - ref))))

    # bf16 MXU path (optimized default): f32 accumulation/epilogue, loose tol.
    out_bf16 = jax.block_until_ready(conv_block_forward(x_nhwc, params))
    assert out_bf16.shape == (N, H, W, Cout)
    assert jnp.allclose(out_bf16, ref, atol=5e-2, rtol=5e-2), (
        float(jnp.max(jnp.abs(out_bf16 - ref))))

    print("KERNEL_OK")
</pallas_src>

<mosaic_0001>
module attributes {stable_mosaic.version = 11 : i64} {
  func.func @kernel(%arg0: i32, %arg1: memref<1x16x64xf32, #tpu.memory_space<vmem>>, %arg2: memref<192x128xf32, #tpu.memory_space<vmem>>, %arg3: memref<1x128xf32, #tpu.memory_space<vmem>>, %arg4: memref<448x256xf32, #tpu.memory_space<vmem>>, %arg5: memref<1x256xf32, #tpu.memory_space<vmem>>, %arg6: memref<1x16x128xf32, #tpu.memory_space<vmem>>, %arg7: memref<18x64xf32, #tpu.memory_space<vmem>>, %arg8: memref<18x128xf32, #tpu.memory_space<vmem>>) attributes {dimension_semantics = [#tpu.dimension_semantics<parallel>], iteration_bounds = array<i64: 2>, scalar_prefetch = 0 : i64, scratch_operands = 2 : i64, tpu.core_type = #tpu.core_type<tc>, window_params = [{transform_indices = @transform_0, window_bounds = array<i64: 1, 16, 64>}, {pipeline_mode = #tpu.pipeline_mode<synchronous>, transform_indices = @transform_1, window_bounds = array<i64: 192, 128>}, {pipeline_mode = #tpu.pipeline_mode<synchronous>, transform_indices = @transform_2, window_bounds = array<i64: 1, 128>}, {pipeline_mode = #tpu.pipeline_mode<synchronous>, transform_indices = @transform_3, window_bounds = array<i64: 448, 256>}, {pipeline_mode = #tpu.pipeline_mode<synchronous>, transform_indices = @transform_4, window_bounds = array<i64: 1, 256>}, {transform_indices = @transform_5, window_bounds = array<i64: 1, 16, 128>}]} {
    %c0 = arith.constant 0 : index
    %c0_0 = arith.constant 0 : index
    %c0_1 = arith.constant 0 : index
    %0 = vector.load %arg1[%c0, %c0_0, %c0_1] : memref<1x16x64xf32, #tpu.memory_space<vmem>>, vector<1x16x64xf32>
    %1 = vector.shape_cast %0 : vector<1x16x64xf32> to vector<16x64xf32>
    %cst = arith.constant 0.000000e+00 : f32
    %2 = vector.broadcast %cst : f32 to vector<1x64xf32>
    %c0_2 = arith.constant 0 : index
    %c0_3 = arith.constant 0 : index
    %3 = vector.load %arg7[%c0_2, %c0_3] : memref<18x64xf32, #tpu.memory_space<vmem>>, vector<1x64xf32>
    tpu.vector_store %arg7[%c0_2, %c0_3], %2 {strides = array<i32>} : memref<18x64xf32, #tpu.memory_space<vmem>>, vector<1x64xf32>,
    %cst_4 = arith.constant 0.000000e+00 : f32
    %4 = vector.broadcast %cst_4 : f32 to vector<1x64xf32>
    %c17 = arith.constant 17 : index
    %c0_5 = arith.constant 0 : index
    %5 = vector.load %arg7[%c17, %c0_5] : memref<18x64xf32, #tpu.memory_space<vmem>>, vector<1x64xf32>
    tpu.vector_store %arg7[%c17, %c0_5], %4 {strides = array<i32>} : memref<18x64xf32, #tpu.memory_space<vmem>>, vector<1x64xf32>,
    %c1 = arith.constant 1 : index
    %c0_6 = arith.constant 0 : index
    %6 = vector.load %arg7[%c1, %c0_6] : memref<18x64xf32, #tpu.memory_space<vmem>>, vector<16x64xf32>
    tpu.vector_store %arg7[%c1, %c0_6], %1 {strides = array<i32>} : memref<18x64xf32, #tpu.memory_space<vmem>>, vector<16x64xf32>,
    %c0_7 = arith.constant 0 : index
    %c0_8 = arith.constant 0 : index
    %7 = vector.load %arg7[%c0_7, %c0_8] : memref<18x64xf32, #tpu.memory_space<vmem>>, vector<16x64xf32>
    %c1_9 = arith.constant 1 : index
    %c0_10 = arith.constant 0 : index
    %8 = vector.load %arg7[%c1_9, %c0_10] : memref<18x64xf32, #tpu.memory_space<vmem>>, vector<16x64xf32>
    %c2 = arith.constant 2 : index
    %c0_11 = arith.constant 0 : index
    %9 = vector.load %arg7[%c2, %c0_11] : memref<18x64xf32, #tpu.memory_space<vmem>>, vector<16x64xf32>
    %10 = tpu.concatenate %7, %8, %9 in 1 : vector<16x64xf32>, vector<16x64xf32>, vector<16x64xf32> -> vector<16x192xf32>
    %c0_12 = arith.constant 0 : index
    %c0_13 = arith.constant 0 : index
    %11 = vector.load %arg2[%c0_12, %c0_13] : memref<192x128xf32, #tpu.memory_space<vmem>>, vector<192x128xf32>
    %cst_14 = arith.constant dense<0.000000e+00> : vector<16x128xf32>
    %12 = tpu.matmul %10, %11, %cst_14 {dimension_numbers = #tpu.dot_dimension_numbers<[1], [0], [0], [1], [0, 0, 1, 1], [], []>} : vector<16x192xf32>, vector<192x128xf32>, vector<16x128xf32> -> vector<16x128xf32>
    %c0_15 = arith.constant 0 : index
    %c0_16 = arith.constant 0 : index
    %13 = vector.load %arg3[%c0_15, %c0_16] : memref<1x128xf32, #tpu.memory_space<vmem>>, vector<1x128xf32>
    %14 = vector.broadcast %13 : vector<1x128xf32> to vector<16x128xf32>
    %15 = arith.addf %12, %14 : vector<16x128xf32>
    %cst_17 = arith.constant 0.000000e+00 : f32
    %16 = vector.broadcast %cst_17 : f32 to vector<16x128xf32>
    %17 = arith.cmpf oge, %15, %16 : vector<16x128xf32>
    %cst_18 = arith.constant 0.00999999977 : f32
    %18 = vector.broadcast %cst_18 : f32 to vector<16x128xf32>
    %19 = arith.mulf %18, %15 : vector<16x128xf32>
    %20 = arith.select %17, %15, %19 : vector<16x128xi1>, vector<16x128xf32>
    %cst_19 = arith.constant 0.000000e+00 : f32
    %21 = vector.broadcast %cst_19 : f32 to vector<1x128xf32>
    %c0_20 = arith.constant 0 : index
    %c0_21 = arith.constant 0 : index
    %22 = vector.load %arg8[%c0_20, %c0_21] : memref<18x128xf32, #tpu.memory_space<vmem>>, vector<1x128xf32>
    tpu.vector_store %arg8[%c0_20, %c0_21], %21 {strides = array<i32>} : memref<18x128xf32, #tpu.memory_space<vmem>>, vector<1x128xf32>,
    %cst_22 = arith.constant 0.000000e+00 : f32
    %23 = vector.broadcast %cst_22 : f32 to vector<1x128xf32>
    %c17_23 = arith.constant 17 : index
    %c0_24 = arith.constant 0 : index
    %24 = vector.load %arg8[%c17_23, %c0_24] : memref<18x128xf32, #tpu.memory_space<vmem>>, vector<1x128xf32>
    tpu.vector_store %arg8[%c17_23, %c0_24], %23 {strides = array<i32>} : memref<18x128xf32, #tpu.memory_space<vmem>>, vector<1x128xf32>,
    %c1_25 = arith.constant 1 : index
    %c0_26 = arith.constant 0 : index
    %25 = vector.load %arg8[%c1_25, %c0_26] : memref<18x128xf32, #tpu.memory_space<vmem>>, vector<16x128xf32>
    tpu.vector_store %arg8[%c1_25, %c0_26], %20 {strides = array<i32>} : memref<18x128xf32, #tpu.memory_space<vmem>>, vector<16x128xf32>,
    %c0_27 = arith.constant 0 : index
    %c0_28 = arith.constant 0 : index
    %26 = vector.load %arg8[%c0_27, %c0_28] : memref<18x128xf32, #tpu.memory_space<vmem>>, vector<16x128xf32>
    %c1_29 = arith.constant 1 : index
    %c0_30 = arith.constant 0 : index
    %27 = vector.load %arg8[%c1_29, %c0_30] : memref<18x128xf32, #tpu.memory_space<vmem>>, vector<16x128xf32>
    %c2_31 = arith.constant 2 : index
    %c0_32 = arith.constant 0 : index
    %28 = vector.load %arg8[%c2_31, %c0_32] : memref<18x128xf32, #tpu.memory_space<vmem>>, vector<16x128xf32>
    %29 = tpu.concatenate %26, %27, %28, %1 in 1 : vector<16x128xf32>, vector<16x128xf32>, vector<16x128xf32>, vector<16x64xf32> -> vector<16x448xf32>
    %c0_33 = arith.constant 0 : index
    %c0_34 = arith.constant 0 : index
    %30 = vector.load %arg4[%c0_33, %c0_34] : memref<448x256xf32, #tpu.memory_space<vmem>>, vector<448x256xf32>
    %cst_35 = arith.constant dense<0.000000e+00> : vector<16x256xf32>
    %31 = tpu.matmul %29, %30, %cst_35 {dimension_numbers = #tpu.dot_dimension_numbers<[1], [0], [0], [1], [0, 0, 1, 1], [], []>} : vector<16x448xf32>, vector<448x256xf32>, vector<16x256xf32> -> vector<16x256xf32>
    %c0_36 = arith.constant 0 : index
    %c0_37 = arith.constant 0 : index
    %32 = vector.load %arg5[%c0_36, %c0_37] : memref<1x256xf32, #tpu.memory_space<vmem>>, vector<1x256xf32>
    %33 = vector.broadcast %32 : vector<1x256xf32> to vector<16x256xf32>
    %34 = arith.addf %31, %33 : vector<16x256xf32>
    %35 = vector.extract_strided_slice %34 {offsets = [0, 0], sizes = [16, 128], strides = [1, 1]} : vector<16x256xf32> to vector<16x128xf32>
    %cst_38 = arith.constant 0.000000e+00 : f32
    %36 = vector.broadcast %cst_38 : f32 to vector<16x128xf32>
    %37 = arith.cmpf oge, %35, %36 : vector<16x128xf32>
    %cst_39 = arith.constant 0.00999999977 : f32
    %38 = vector.broadcast %cst_39 : f32 to vector<16x128xf32>
    %39 = arith.mulf %38, %35 : vector<16x128xf32>
    %40 = arith.select %37, %35, %39 : vector<16x128xi1>, vector<16x128xf32>
    %41 = vector.extract_strided_slice %34 {offsets = [0, 128], sizes = [16, 128], strides = [1, 1]} : vector<16x256xf32> to vector<16x128xf32>
    %42 = arith.addf %40, %41 : vector<16x128xf32>
    %c0_40 = arith.constant 0 : index
    %c0_41 = arith.constant 0 : index
    %c0_42 = arith.constant 0 : index
    %43 = vector.load %arg6[%c0_40, %c0_41, %c0_42] : memref<1x16x128xf32, #tpu.memory_space<vmem>>, vector<1x16x128xf32>
    %44 = vector.shape_cast %43 : vector<1x16x128xf32> to vector<16x128xf32>
    %45 = vector.shape_cast %42 : vector<16x128xf32> to vector<1x16x128xf32>
    tpu.vector_store %arg6[%c0_40, %c0_41, %c0_42], %45 {strides = array<i32>} : memref<1x16x128xf32, #tpu.memory_space<vmem>>, vector<1x16x128xf32>,
    return
  }
  func.func @transform_0(%arg0: i32) -> (i32, i32, i32) {
    %c0_i32 = arith.constant 0 : i32
    %c0_i32_0 = arith.constant 0 : i32
    %c0_i32_1 = arith.constant 0 : i32
    return %arg0, %c0_i32, %c0_i32_0 : i32, i32, i32
  }
  func.func @transform_1(%arg0: i32) -> (i32, i32) {
    %c0_i32 = arith.constant 0 : i32
    %c0_i32_0 = arith.constant 0 : i32
    %c0_i32_1 = arith.constant 0 : i32
    return %c0_i32, %c0_i32_0 : i32, i32
  }
  func.func @transform_2(%arg0: i32) -> (i32, i32) {
    %c0_i32 = arith.constant 0 : i32
    %c0_i32_0 = arith.constant 0 : i32
    %c0_i32_1 = arith.constant 0 : i32
    return %c0_i32, %c0_i32_0 : i32, i32
  }
  func.func @transform_3(%arg0: i32) -> (i32, i32) {
    %c0_i32 = arith.constant 0 : i32
    %c0_i32_0 = arith.constant 0 : i32
    %c0_i32_1 = arith.constant 0 : i32
    return %c0_i32, %c0_i32_0 : i32, i32
  }
  func.func @transform_4(%arg0: i32) -> (i32, i32) {
    %c0_i32 = arith.constant 0 : i32
    %c0_i32_0 = arith.constant 0 : i32
    %c0_i32_1 = arith.constant 0 : i32
    return %c0_i32, %c0_i32_0 : i32, i32
  }
  func.func @transform_5(%arg0: i32) -> (i32, i32, i32) {
    %c0_i32 = arith.constant 0 : i32
    %c0_i32_0 = arith.constant 0 : i32
    %c0_i32_1 = arith.constant 0 : i32
    return %arg0, %c0_i32, %c0_i32_0 : i32, i32, i32
  }
}

</mosaic_0001>

<llo_original>
// kernel: tile.23
$region0: #{tile.23}
  #allocation0 [shape = 's32[1]{0}', space=sflag, size = 0x4, scoped, tag = 'scoped memory for tile.23']
  %s0 = inlined_call_operand.vmem [shape: f32[8], index: 0, kind: input, shape index: {}]
  %s1 = inlined_call_operand.vmem [shape: f32[16,8], index: 1, kind: output, shape index: {}]
  // Predicated region
  $region2: #{tile.23} parent=0 // pred_check
    _
  $region3: #{tile.23} parent=0 // pred_check_branch
    %3 = sbr.rel (0) target = $region5
  $region4: #{tile.23} parent=0 // pred_region
    _
  $region5: #{tile.23} parent=0 // pred_fallthru
    _
  %v4 = vld [vmem:[%s0] ss:$0 sm:$0xff]
  %5 = vst [vmem:[%s1] sm:$0xff] %v4
  %s6 = scalar_lea.vmem %s1, 8
  %7 = vst [vmem:[%s6] sm:$0xff] %v4

// kernel: tile.24
$region0: #{tile.24}
  %s0 = inlined_call_operand.vmem [shape: f32[16,8], index: 0, kind: input, shape index: {}]
  %s1 = inlined_call_operand.vmem [shape: f32[128], index: 1, kind: output, shape index: {}]
  $region1: #{tile.24} parent=0
    #allocation0 [shape = 'u8[4096]{0}', space=vmem, size = 0x1000, scoped, tag = 'scoped mem for output reshape']
    %v2 = vld [vmem:[%s0] sm:$0x1]
    %vm3 = vcmask 64512
    %4 = vst.msk [vmem:[#allocation0] sm:$0x1] %vm3, %v2
    %s5 = scalar_lea.vmem %s0, 15
    %v6 = vld [vmem:[%s5] sm:$0x1]
    %7 = vrot.lane.b32.xlu0 %v6, 120
    %v8 = vpop.permute.xlu0 %7
    %vm9 = vcmask 1048512
    %10 = vst.msk [vmem:[#allocation0] sm:$0x1] %vm9, %v8
    %s11 = scalar_lea.vmem %s0, 14
    %v12 = vld [vmem:[%s11] sm:$0x1]
    %13 = vrot.lane.b32.xlu0 %v12, 112
    %v14 = vpop.permute.xlu0 %13
    %vm15 = vcmask 982912
    %16 = vst.msk [vmem:[#allocation0] sm:$0x1] %vm15, %v14
    %s17 = scalar_lea.vmem %s0, 13
    %v18 = vld [vmem:[%s17] sm:$0x1]
    %19 = vrot.lane.b32.xlu0 %v18, 104
    %v20 = vpop.permute.xlu0 %19
    %vm21 = vcmask 917312
    %22 = vst.msk [vmem:[#allocation0] sm:$0x1] %vm21, %v20
    %s23 = scalar_lea.vmem %s0, 12
    %v24 = vld [vmem:[%s23] sm:$0x1]
    %25 = vrot.lane.b32.xlu0 %v24, 96
    %v26 = vpop.permute.xlu0 %25
    %vm27 = vcmask 851712
    %28 = vst.msk [vmem:[#allocation0] sm:$0x1] %vm27, %v26
    %s29 = scalar_lea.vmem %s0, 11
    %v30 = vld [vmem:[%s29] sm:$0x1]
    %31 = vrot.lane.b32.xlu0 %v30, 88
    %v32 = vpop.permute.xlu0 %31
    %vm33 = vcmask 786112
    %34 = vst.msk [vmem:[#allocation0] sm:$0x1] %vm33, %v32
    %s35 = scalar_lea.vmem %s0, 10
    %v36 = vld [vmem:[%s35] sm:$0x1]
    %37 = vrot.lane.b32.xlu0 %v36, 80
    %v38 = vpop.permute.xlu0 %37
    %vm39 = vcmask 720512
    %40 = vst.msk [vmem:[#allocation0] sm:$0x1] %vm39, %v38
    %s41 = scalar_lea.vmem %s0, 9
    %v42 = vld [vmem:[%s41] sm:$0x1]
    %43 = vrot.lane.b32.xlu0 %v42, 72
    %v44 = vpop.permute.xlu0 %43
    %vm45 = vcmask 654912
    %46 = vst.msk [vmem:[#allocation0] sm:$0x1] %vm45, %v44
    %s47 = scalar_lea.vmem %s0, 8
    %v48 = vld [vmem:[%s47] sm:$0x1]
    %49 = vrot.lane.b32.xlu0 %v48, 64
    %v50 = vpop.permute.xlu0 %49
    %vm51 = vcmask 589312
    %52 = vst.msk [vmem:[#allocation0] sm:$0x1] %vm51, %v50
    %s53 = scalar_lea.vmem %s0, 7
    %v54 = vld [vmem:[%s53] sm:$0x1]
    %55 = vrot.lane.b32.xlu0 %v54, 56
    %v56 = vpop.permute.xlu0 %55
    %vm57 = vcmask 523712
    %58 = vst.msk [vmem:[#allocation0] sm:$0x1] %vm57, %v56
    %s59 = scalar_lea.vmem %s0, 6
    %v60 = vld [vmem:[%s59] sm:$0x1]
    %61 = vrot.lane.b32.xlu0 %v60, 48
    %v62 = vpop.permute.xlu0 %61
    %vm63 = vcmask 458112
    %64 = vst.msk [vmem:[#allocation0] sm:$0x1] %vm63, %v62
    %s65 = scalar_lea.vmem %s0, 5
    %v66 = vld [vmem:[%s65] sm:$0x1]
    %67 = vrot.lane.b32.xlu0 %v66, 40
    %v68 = vpop.permute.xlu0 %67
    %vm69 = vcmask 392512
    %70 = vst.msk [vmem:[#allocation0] sm:$0x1] %vm69, %v68
    %s71 = scalar_lea.vmem %s0, 4
    %v72 = vld [vmem:[%s71] sm:$0x1]
    %73 = vrot.lane.b32.xlu0 %v72, 32
    %v74 = vpop.permute.xlu0 %73
    %vm75 = vcmask 326912
    %76 = vst.msk [vmem:[#allocation0] sm:$0x1] %vm75, %v74
    %s77 = scalar_lea.vmem %s0, 3
    %v78 = vld [vmem:[%s77] sm:$0x1]
    %79 = vrot.lane.b32.xlu0 %v78, 24
    %v80 = vpop.permute.xlu0 %79
    %vm81 = vcmask 261312
    %82 = vst.msk [vmem:[#allocation0] sm:$0x1] %vm81, %v80
    %s83 = scalar_lea.vmem %s0, 2
    %v84 = vld [vmem:[%s83] sm:$0x1]
    %85 = vrot.lane.b32.xlu0 %v84, 16
    %v86 = vpop.permute.xlu0 %85
    %vm87 = vcmask 195712
    %88 = vst.msk [vmem:[#allocation0] sm:$0x1] %vm87, %v86
    %s89 = scalar_lea.vmem %s0, 1
    %v90 = vld [vmem:[%s89] sm:$0x1]
    %91 = vrot.lane.b32.xlu0 %v90, 8
    %v92 = vpop.permute.xlu0 %91
    %vm93 = vcmask 130112
    %94 = vst.msk [vmem:[#allocation0] sm:$0x1] %vm93, %v92
    %s96 = sshll.u32 1, 1
    %s97 = ssub.s32 %s96, 1
    %v99 = vld [vmem:[#allocation0] sm:%s97]
    %s100 = sshll.u32 1, 1
    %s101 = ssub.s32 %s100, 1
    %102 = vst [vmem:[%s1] sm:%s101] %v99

// kernel: tile.19
$region0: #{tile.19}
  %s0 = inlined_call_operand.vmem [shape: f32[16,8], index: 0, kind: input, shape index: {}]
  %s1 = inlined_call_operand.vmem [shape: f32[1,128], index: 1, kind: output, shape index: {}]
  $region1: #{tile.19} parent=0
    #allocation0 [shape = 'u8[4096]{0}', space=vmem, size = 0x1000, scoped, tag = 'scoped mem for output reshape']
    %v2 = vld [vmem:[%s0] sm:$0x1]
    %vm3 = vcmask 64512
    %4 = vst.msk [vmem:[#allocation0] sm:$0x1] %vm3, %v2
    %s5 = scalar_lea.vmem %s0, 15
    %v6 = vld [vmem:[%s5] sm:$0x1]
    %7 = vrot.lane.b32.xlu0 %v6, 120
    %v8 = vpop.permute.xlu0 %7
    %vm9 = vcmask 1048512
    %10 = vst.msk [vmem:[#allocation0] sm:$0x1] %vm9, %v8
    %s11 = scalar_lea.vmem %s0, 14
    %v12 = vld [vmem:[%s11] sm:$0x1]
    %13 = vrot.lane.b32.xlu0 %v12, 112
    %v14 = vpop.permute.xlu0 %13
    %vm15 = vcmask 982912
    %16 = vst.msk [vmem:[#allocation0] sm:$0x1] %vm15, %v14
    %s17 = scalar_lea.vmem %s0, 13
    %v18 = vld [vmem:[%s17] sm:$0x1]
    %19 = vrot.lane.b32.xlu0 %v18, 104
    %v20 = vpop.permute.xlu0 %19
    %vm21 = vcmask 917312
    %22 = vst.msk [vmem:[#allocation0] sm:$0x1] %vm21, %v20
    %s23 = scalar_lea.vmem %s0, 12
    %v24 = vld [vmem:[%s23] sm:$0x1]
    %25 = vrot.lane.b32.xlu0 %v24, 96
    %v26 = vpop.permute.xlu0 %25
    %vm27 = vcmask 851712
    %28 = vst.msk [vmem:[#allocation0] sm:$0x1] %vm27, %v26
    %s29 = scalar_lea.vmem %s0, 11
    %v30 = vld [vmem:[%s29] sm:$0x1]
    %31 = vrot.lane.b32.xlu0 %v30, 88
    %v32 = vpop.permute.xlu0 %31
    %vm33 = vcmask 786112
    %34 = vst.msk [vmem:[#allocation0] sm:$0x1] %vm33, %v32
    %s35 = scalar_lea.vmem %s0, 10
    %v36 = vld [vmem:[%s35] sm:$0x1]
    %37 = vrot.lane.b32.xlu0 %v36, 80
    %v38 = vpop.permute.xlu0 %37
    %vm39 = vcmask 720512
    %40 = vst.msk [vmem:[#allocation0] sm:$0x1] %vm39, %v38
    %s41 = scalar_lea.vmem %s0, 9
    %v42 = vld [vmem:[%s41] sm:$0x1]
    %43 = vrot.lane.b32.xlu0 %v42, 72
    %v44 = vpop.permute.xlu0 %43
    %vm45 = vcmask 654912
    %46 = vst.msk [vmem:[#allocation0] sm:$0x1] %vm45, %v44
    %s47 = scalar_lea.vmem %s0, 8
    %v48 = vld [vmem:[%s47] sm:$0x1]
    %49 = vrot.lane.b32.xlu0 %v48, 64
    %v50 = vpop.permute.xlu0 %49
    %vm51 = vcmask 589312
    %52 = vst.msk [vmem:[#allocation0] sm:$0x1] %vm51, %v50
    %s53 = scalar_lea.vmem %s0, 7
    %v54 = vld [vmem:[%s53] sm:$0x1]
    %55 = vrot.lane.b32.xlu0 %v54, 56
    %v56 = vpop.permute.xlu0 %55
    %vm57 = vcmask 523712
    %58 = vst.msk [vmem:[#allocation0] sm:$0x1] %vm57, %v56
    %s59 = scalar_lea.vmem %s0, 6
    %v60 = vld [vmem:[%s59] sm:$0x1]
    %61 = vrot.lane.b32.xlu0 %v60, 48
    %v62 = vpop.permute.xlu0 %61
    %vm63 = vcmask 458112
    %64 = vst.msk [vmem:[#allocation0] sm:$0x1] %vm63, %v62
    %s65 = scalar_lea.vmem %s0, 5
    %v66 = vld [vmem:[%s65] sm:$0x1]
    %67 = vrot.lane.b32.xlu0 %v66, 40
    %v68 = vpop.permute.xlu0 %67
    %vm69 = vcmask 392512
    %70 = vst.msk [vmem:[#allocation0] sm:$0x1] %vm69, %v68
    %s71 = scalar_lea.vmem %s0, 4
    %v72 = vld [vmem:[%s71] sm:$0x1]
    %73 = vrot.lane.b32.xlu0 %v72, 32
    %v74 = vpop.permute.xlu0 %73
    %vm75 = vcmask 326912
    %76 = vst.msk [vmem:[#allocation0] sm:$0x1] %vm75, %v74
    %s77 = scalar_lea.vmem %s0, 3
    %v78 = vld [vmem:[%s77] sm:$0x1]
    %79 = vrot.lane.b32.xlu0 %v78, 24
    %v80 = vpop.permute.xlu0 %79
    %vm81 = vcmask 261312
    %82 = vst.msk [vmem:[#allocation0] sm:$0x1] %vm81, %v80
    %s83 = scalar_lea.vmem %s0, 2
    %v84 = vld [vmem:[%s83] sm:$0x1]
    %85 = vrot.lane.b32.xlu0 %v84, 16
    %v86 = vpop.permute.xlu0 %85
    %vm87 = vcmask 195712
    %88 = vst.msk [vmem:[#allocation0] sm:$0x1] %vm87, %v86
    %s89 = scalar_lea.vmem %s0, 1
    %v90 = vld [vmem:[%s89] sm:$0x1]
    %91 = vrot.lane.b32.xlu0 %v90, 8
    %v92 = vpop.permute.xlu0 %91
    %vm93 = vcmask 130112
    %94 = vst.msk [vmem:[#allocation0] sm:$0x1] %vm93, %v92
    %s96 = sshll.u32 1, 1
    %s97 = ssub.s32 %s96, 1
    %v99 = vld [vmem:[#allocation0] sm:%s97]
    %s100 = sshll.u32 1, 1
    %s101 = ssub.s32 %s100, 1
    %102 = vst [vmem:[%s1] sm:%s101] %v99

// kernel: conv_block_forward.1
$region0: #{conv_block_forward.1}
  #allocation0 [shape = 'u32[]', space=smem, size = 0x4, offset = 0x4, fixed_abs, tag = 'smem constant byte address 0x4 - core index']
  #allocation1 [shape = 'u32[144,128]{1,0:T(1,128)}', space=vmem, size = 0x12000, scoped, tag = 'internal scratch']
  #allocation2 [shape = 'f32[18,64]{1,0:T(8,128)}', space=vmem, size = 0x3000, scoped, tag = 'scratch operand']
  #allocation3 [shape = 'f32[18,128]{1,0:T(8,128)}', space=vmem, size = 0x3000, scoped, tag = 'scratch operand']
  %s0 = inlined_call_operand.vmem [shape: f32[2,16,64], index: 0, kind: input, shape index: {}]
  %s1 = inlined_call_operand.vmem [shape: f32[192,128], index: 1, kind: input, shape index: {}]
  %s2 = inlined_call_operand.vmem [shape: f32[1,128], index: 2, kind: input, shape index: {}]
  %s3 = inlined_call_operand.vmem [shape: f32[448,256], index: 3, kind: input, shape index: {}]
  %s4 = inlined_call_operand.vmem [shape: f32[1,256], index: 4, kind: input, shape index: {}]
  %s5 = inlined_call_operand.vmem [shape: f32[2,16,128], index: 5, kind: output, shape index: {}]
  %s6 = sld [smem:[#allocation0]]
  $region53: #{conv_block_forward.1} parent=0
    _
  %s8 = ssub.s32 1, %s6
  %s9 = scalar_select 0, %s8, %s6
  loop: start=0, step=1, limit=4
  $region2: #{conv_block_forward.1} parent=0 // loop_pre_header
    _
  $region3: #{conv_block_forward.1} parent=0 // loop_header
    %s11 = sphi 0, %s15
    %p12 = scmp.ge.s32.totalorder %s11, 4
    %s21 = sphi 0, %s23
    %s24 = sphi 0, %s21
    %s25 = sphi 0, %s24
    %s41 = sphi 0, %s25
    %s45 = sphi 0, %s45
    %s47 = sphi 0, %s45
    %s48 = sphi 0, %s47
    %s62 = sphi 0, %s48
    %s66 = sphi 0, %s66
    %s68 = sphi 0, %s66
    %s69 = sphi 0, %s68
    %s83 = sphi 0, %s69
    %s87 = sphi 0, %s87
    %s89 = sphi 0, %s87
    %s90 = sphi 0, %s89
    %s104 = sphi 0, %s90
    %s108 = sphi 0, %s108
    %s110 = sphi 0, %s108
    %s111 = sphi 0, %s110
    %s125 = sphi 0, %s111
    %s131 = sphi 0, %s133
    %s134 = sphi 0, %s131
    %s135 = sphi 0, %s134
    %s151 = sphi 0, %s135
  $region4: #{conv_block_forward.1} parent=0 // loop_header_branch
    %14 = sbr.rel (%p12) target = $region8
  $region5: #{conv_block_forward.1} parent=0 // loop_body
    %s16 = ssub.s32 %s11, 1
    %s17 = ssub.s32 %s11, 2
    %s18 = sadd.s32 %s11, 1
    %s19 = ssub.s32 %s11, %s18
    %p20 = scmp.eq.s32.totalorder %s19, 0
    %s22 = sadd.s32 %s21, 1
    %s23 = scalar_select %p20, %s21, %s22
    %p26 = pneg %p20
    %p27 = scmp.eq.s32.totalorder %s11, 1
    %p28 = por %p26, %p27
    %p29 = scmp.ne.s32.totalorder %s21, %s24
    %p30 = scmp.eq.s32.totalorder %s11, 0
    %p31 = por %p29, %p30
    %p32 = scmp.ne.s32.totalorder %s21, %s24
    %p33 = scmp.eq.s32.totalorder %s16, 1
    %p34 = por %p32, %p33
    %p35 = scmp.ne.s32.totalorder %s24, %s25
    %p36 = scmp.eq.s32.totalorder %s16, 0
    %p37 = por %p35, %p36
    %p38 = scmp.ne.s32.totalorder %s24, %s25
    %p39 = scmp.eq.s32.totalorder %s17, 1
    %p40 = por %p38, %p39
    %p42 = scmp.ne.s32.totalorder %s25, %s41
    %p43 = scmp.eq.s32.totalorder %s17, 0
    %p44 = por %p42, %p43
    %s46 = sadd.s32 %s45, 1
    %p49 = scmp.eq.s32.totalorder %s11, 1
    %p50 = scmp.ne.s32.totalorder %s45, %s47
    %p51 = scmp.eq.s32.totalorder %s11, 0
    %p52 = por %p50, %p51
    %p53 = scmp.ne.s32.totalorder %s45, %s47
    %p54 = scmp.eq.s32.totalorder %s16, 1
    %p55 = por %p53, %p54
    %p56 = scmp.ne.s32.totalorder %s47, %s48
    %p57 = scmp.eq.s32.totalorder %s16, 0
    %p58 = por %p56, %p57
    %p59 = scmp.ne.s32.totalorder %s47, %s48
    %p60 = scmp.eq.s32.totalorder %s17, 1
    %p61 = por %p59, %p60
    %p63 = scmp.ne.s32.totalorder %s48, %s62
    %p64 = scmp.eq.s32.totalorder %s17, 0
    %p65 = por %p63, %p64
    %s67 = sadd.s32 %s66, 1
    %p70 = scmp.eq.s32.totalorder %s11, 1
    %p71 = scmp.ne.s32.totalorder %s66, %s68
    %p72 = scmp.eq.s32.totalorder %s11, 0
    %p73 = por %p71, %p72
    %p74 = scmp.ne.s32.totalorder %s66, %s68
    %p75 = scmp.eq.s32.totalorder %s16, 1
    %p76 = por %p74, %p75
    %p77 = scmp.ne.s32.totalorder %s68, %s69
    %p78 = scmp.eq.s32.totalorder %s16, 0
    %p79 = por %p77, %p78
    %p80 = scmp.ne.s32.totalorder %s68, %s69
    %p81 = scmp.eq.s32.totalorder %s17, 1
    %p82 = por %p80, %p81
    %p84 = scmp.ne.s32.totalorder %s69, %s83
    %p85 = scmp.eq.s32.totalorder %s17, 0
    %p86 = por %p84, %p85
    %s88 = sadd.s32 %s87, 1
    %p91 = scmp.eq.s32.totalorder %s11, 1
    %p92 = scmp.ne.s32.totalorder %s87, %s89
    %p93 = scmp.eq.s32.totalorder %s11, 0
    %p94 = por %p92, %p93
    %p95 = scmp.ne.s32.totalorder %s87, %s89
    %p96 = scmp.eq.s32.totalorder %s16, 1
    %p97 = por %p95, %p96
    %p98 = scmp.ne.s32.totalorder %s89, %s90
    %p99 = scmp.eq.s32.totalorder %s16, 0
    %p100 = por %p98, %p99
    %p101 = scmp.ne.s32.totalorder %s89, %s90
    %p102 = scmp.eq.s32.totalorder %s17, 1
    %p103 = por %p101, %p102
    %p105 = scmp.ne.s32.totalorder %s90, %s104
    %p106 = scmp.eq.s32.totalorder %s17, 0
    %p107 = por %p105, %p106
    %s109 = sadd.s32 %s108, 1
    %p112 = scmp.eq.s32.totalorder %s11, 1
    %p113 = scmp.ne.s32.totalorder %s108, %s110
    %p114 = scmp.eq.s32.totalorder %s11, 0
    %p115 = por %p113, %p114
    %p116 = scmp.ne.s32.totalorder %s108, %s110
    %p117 = scmp.eq.s32.totalorder %s16, 1
    %p118 = por %p116, %p117
    %p119 = scmp.ne.s32.totalorder %s110, %s111
    %p120 = scmp.eq.s32.totalorder %s16, 0
    %p121 = por %p119, %p120
    %p122 = scmp.ne.s32.totalorder %s110, %s111
    %p123 = scmp.eq.s32.totalorder %s17, 1
    %p124 = por %p122, %p123
    %p126 = scmp.ne.s32.totalorder %s111, %s125
    %p127 = scmp.eq.s32.totalorder %s17, 0
    %p128 = por %p126, %p127
    %s129 = ssub.s32 %s11, %s18
    %p130 = scmp.eq.s32.totalorder %s129, 0
    %s132 = sadd.s32 %s131, 1
    %s133 = scalar_select %p130, %s131, %s132
    %p136 = pneg %p130
    %p137 = scmp.eq.s32.totalorder %s11, 1
    %p138 = por %p136, %p137
    %p139 = scmp.ne.s32.totalorder %s131, %s134
    %p140 = scmp.eq.s32.totalorder %s11, 0
    %p141 = por %p139, %p140
    %p142 = scmp.ne.s32.totalorder %s131, %s134
    %p143 = scmp.eq.s32.totalorder %s16, 1
    %p144 = por %p142, %p143
    %p145 = scmp.ne.s32.totalorder %s134, %s135
    %p146 = scmp.eq.s32.totalorder %s16, 0
    %p147 = por %p145, %p146
    %p148 = scmp.ne.s32.totalorder %s134, %s135
    %p149 = scmp.eq.s32.totalorder %s17, 1
    %p150 = por %p148, %p149
    %p152 = scmp.ne.s32.totalorder %s135, %s151
    %p153 = scmp.eq.s32.totalorder %s17, 0
    %p154 = por %p152, %p153
    %p155 = scmp.le.s32.totalorder 1, %s11
    %p156 = scmp.lt.s32.totalorder %s11, 3
    %p157 = pnand %p155, %p156
    %p158 = pneg %p157
    // Predicated region
    $region9: #{conv_block_forward.1} parent=5 // pred_check
      _
    $region10: #{conv_block_forward.1} parent=5 // pred_check_branch
      %160 = sbr.rel (%p157) target = $region12
    $region11: #{conv_block_forward.1} parent=5 // pred_region
      %s161 = ssub.s32 %s11, 1
      // Predicated region
      $region13: #{conv_block_forward.1} parent=11 // pred_check
        %p162 = pneg %p58
      $region14: #{conv_block_forward.1} parent=11 // pred_check_branch
        %164 = sbr.rel (%p162) target = $region16
      $region15: #{conv_block_forward.1} parent=11 // pred_region
        _
      $region16: #{conv_block_forward.1} parent=11 // pred_fallthru
        _
      // Predicated region
      $region17: #{conv_block_forward.1} parent=11 // pred_check
        %p165 = pneg %p79
      $region18: #{conv_block_forward.1} parent=11 // pred_check_branch
        %167 = sbr.rel (%p165) target = $region20
      $region19: #{conv_block_forward.1} parent=11 // pred_region
        _
      $region20: #{conv_block_forward.1} parent=11 // pred_fallthru
        _
      // Predicated region
      $region21: #{conv_block_forward.1} parent=11 // pred_check
        %p168 = pneg %p100
      $region22: #{conv_block_forward.1} parent=11 // pred_check_branch
        %170 = sbr.rel (%p168) target = $region24
      $region23: #{conv_block_forward.1} parent=11 // pred_region
        _
      $region24: #{conv_block_forward.1} parent=11 // pred_fallthru
        _
      // Predicated region
      $region25: #{conv_block_forward.1} parent=11 // pred_check
        %p171 = pneg %p121
      $region26: #{conv_block_forward.1} parent=11 // pred_check_branch
        %173 = sbr.rel (%p171) target = $region28
      $region27: #{conv_block_forward.1} parent=11 // pred_region
        _
      $region28: #{conv_block_forward.1} parent=11 // pred_fallthru
        _
    $region12: #{conv_block_forward.1} parent=5 // pred_fallthru
      _
    %p174 = scmp.lt.s32.totalorder %s11, 2
    // Predicated region
    $region29: #{conv_block_forward.1} parent=5 // pred_check
      %p175 = pneg %p174
    $region30: #{conv_block_forward.1} parent=5 // pred_check_branch
      %177 = sbr.rel (%p175) target = $region32
    $region31: #{conv_block_forward.1} parent=5 // pred_region
      // Predicated region
      $region33: #{conv_block_forward.1} parent=31 // pred_check
        %p178 = pneg %p31
      $region34: #{conv_block_forward.1} parent=31 // pred_check_branch
        %180 = sbr.rel (%p178) target = $region36
      $region35: #{conv_block_forward.1} parent=31 // pred_region
        %p181 = scmp.lt.s32.totalorder %s11, 1
        %s182 = scalar_select %p181, %s11, 1
        %s183 = smul.addr %s182, 2
        %s184 = smul.addr %s183, 8
        %s185 = scalar_lea.vmem %s0, %s184
      $region36: #{conv_block_forward.1} parent=31 // pred_fallthru
        _
    $region32: #{conv_block_forward.1} parent=5 // pred_fallthru
      _
    %p186 = scmp.le.s32.totalorder 1, %s11
    %p187 = scmp.lt.s32.totalorder %s11, 3
    %p188 = pnand %p186, %p187
    %p189 = pneg %p188
    // Predicated region
    $region37: #{conv_block_forward.1} parent=5 // pred_check
      _
    $region38: #{conv_block_forward.1} parent=5 // pred_check_branch
      %191 = sbr.rel (%p188) target = $region40
    $region39: #{conv_block_forward.1} parent=5 // pred_region
      %s192 = ssub.s32 %s11, 1
      %p193 = scmp.lt.s32.totalorder %s16, 1
      %s194 = scalar_select %p193, %s16, 1
      %s195 = smul.addr %s194, 2
      %s196 = smul.addr %s195, 8
      %s197 = scalar_lea.vmem %s0, %s196
      %p198 = pneg %p37
      %p199 = pneg %p34
      %p200 = pneg %p58
      %p201 = pneg %p55
      %p202 = pneg %p79
      %p203 = pneg %p76
      %p204 = pneg %p100
      %p205 = pneg %p97
      %p206 = pneg %p121
      %p207 = pneg %p118
      %p208 = pneg %p147
      %p209 = pneg %p144
      %p210 = scmp.lt.s32.totalorder %s16, 1
      %s211 = scalar_select %p210, %s16, 1
      %s212 = smul.addr %s211, 2
      %s213 = smul.addr %s212, 8
      %s214 = scalar_lea.vmem %s5, %s213
      %p215 = scmp.lt.s32.totalorder %s16, 1
      %s216 = scalar_select %p215, %s16, 1
      %s217 = smul.addr %s216, 2
      %s218 = smul.addr %s217, 8
      %s219 = scalar_lea.vmem %s0, %s218
      %p220 = scmp.lt.s32.totalorder %s16, 1
      %s221 = scalar_select %p220, %s16, 1
      %s222 = smul.addr %s221, 2
      %s223 = smul.addr %s222, 8
      %s224 = scalar_lea.vmem %s5, %s223
      %v225 = vld [vmem:[%s219] sm:$0xff]
      %v226 = vld [vmem:[%s219 + $0x8] sm:$0xff]
      %vm227 = vcmask 516096
      %228 = vst.msk [vmem:[#allocation2] sm:$0x1] %vm227, 0.0
      %229 = vst.msk [vmem:[#allocation2 + $0x11] sm:$0x1] %vm227, 0.0
      %vm230 = vcmask 523264
      %231 = vst.msk [vmem:[#allocation2 + $0x1] sm:$0xff] %vm230, %v225
      %232 = vst.msk [vmem:[#allocation2 + $0x9] sm:$0xff] %vm230, %v226
      %v233 = vld [vmem:[#allocation2] sm:$0xff]
      %v234 = vld [vmem:[#allocation2 + $0x8] sm:$0xff]
      %v235 = vld [vmem:[#allocation2 + $0x1] sm:$0xff]
      %v236 = vld [vmem:[#allocation2 + $0x9] sm:$0xff]
      %v237 = vld [vmem:[#allocation2 + $0x2] sm:$0xff]
      %v238 = vld [vmem:[#allocation2 + $0xa] sm:$0xff]
      %241 = vrot.lane.b32.xlu0 %v235, 64
      %v242 = vpop.permute.xlu0 %241
      %243 = vrot.lane.b32.xlu0 %v236, 64
      %v244 = vpop.permute.xlu0 %243
      %v247 = vsel %vm230, %v233, %v242
      %v248 = vsel %vm230, %v234, %v244
      %v249 = vld [vmem:[%s1] sm:$0xff]
      %v250 = vld [vmem:[%s1 + $0x8] sm:$0xff]
      %v251 = vld [vmem:[%s1 + $0x10] sm:$0xff]
      %v252 = vld [vmem:[%s1 + $0x18] sm:$0xff]
      %v253 = vld [vmem:[%s1 + $0x20] sm:$0xff]
      %v254 = vld [vmem:[%s1 + $0x28] sm:$0xff]
      %v255 = vld [vmem:[%s1 + $0x30] sm:$0xff]
      %v256 = vld [vmem:[%s1 + $0x38] sm:$0xff]
      %v257 = vld [vmem:[%s1 + $0x40] sm:$0xff]
      %v258 = vld [vmem:[%s1 + $0x48] sm:$0xff]
      %v259 = vld [vmem:[%s1 + $0x50] sm:$0xff]
      %v260 = vld [vmem:[%s1 + $0x58] sm:$0xff]
      %v261 = vld [vmem:[%s1 + $0x60] sm:$0xff]
      %v262 = vld [vmem:[%s1 + $0x68] sm:$0xff]
      %v263 = vld [vmem:[%s1 + $0x70] sm:$0xff]
      %v264 = vld [vmem:[%s1 + $0x78] sm:$0xff]
      %v265 = vld [vmem:[%s1 + $0x80] sm:$0xff]
      %v266 = vld [vmem:[%s1 + $0x88] sm:$0xff]
      %v267 = vld [vmem:[%s1 + $0x90] sm:$0xff]
      %v268 = vld [vmem:[%s1 + $0x98] sm:$0xff]
      %v269 = vld [vmem:[%s1 + $0xa0] sm:$0xff]
      %v270 = vld [vmem:[%s1 + $0xa8] sm:$0xff]
      %v271 = vld [vmem:[%s1 + $0xb0] sm:$0xff]
      %v272 = vld [vmem:[%s1 + $0xb8] sm:$0xff]
      %v273 = vld [vmem:[%s2] sm:$0x1]
      %v275 = vlaneseq
      %v276 = vshrl.u32 %v275, 7
      %v277 = vsub.s32 0, %v276
      %v278 = vrot.slane %v273, %v277
      %v281 = vsel %vm230, %v237, 0
      %v284 = vsel %vm230, %v238, 0
      %286 = vmatprep.subr.mxu0 0.0
      %287 = vmatpush1.msra.mxu0 %v264
      %288 = vmatprep.subr.mxu0 0.0
      %289 = vmatpush1.msra.mxu0 %v263
      %290 = vmatprep.subr.mxu0 0.0
      %291 = vmatpush1.msra.mxu0 %v262
      %292 = vmatprep.subr.mxu0 0.0
      %293 = vmatpush1.msra.mxu0 %v261
      %294 = vmatprep.subr.mxu0 0.0
      %295 = vmatpush1.msra.mxu0 %v260
      %296 = vmatprep.subr.mxu0 0.0
      %297 = vmatpush1.msra.mxu0 %v259
      %298 = vmatprep.subr.mxu0 0.0
      %299 = vmatpush1.msra.mxu0 %v258
      %300 = vmatprep.subr.mxu0 0.0
      %301 = vmatpush1.msra.mxu0 %v257
      %302 = vmatprep.subr.mxu0 0.0
      %303 = vmatpush1.msra.mxu0 %v256
      %304 = vmatprep.subr.mxu0 0.0
      %305 = vmatpush1.msra.mxu0 %v255
      %306 = vmatprep.subr.mxu0 0.0
      %307 = vmatpush1.msra.mxu0 %v254
      %308 = vmatprep.subr.mxu0 0.0
      %309 = vmatpush1.msra.mxu0 %v253
      %310 = vmatprep.subr.mxu0 0.0
      %311 = vmatpush1.msra.mxu0 %v252
      %312 = vmatprep.subr.mxu0 0.0
      %313 = vmatpush1.msra.mxu0 %v251
      %314 = vmatprep.subr.mxu0 0.0
      %315 = vmatpush1.msra.mxu0 %v250
      %316 = vmatprep.subr.mxu0 0.0
      %317 = vmatpush1.msra.mxu0 %v249
      %318 = vmatprep.subr.mxu0 0.0
      %319 = vmatpush2.msra.mxu0 0.0
      %320 = vmatprep.subr.mxu0 0.0
      %321 = vmatpush2.msra.mxu0 0.0
      %322 = vmatprep.subr.mxu0 0.0
      %323 = vmatpush2.msra.mxu0 0.0
      %324 = vmatprep.subr.mxu0 0.0
      %325 = vmatpush2.msra.mxu0 0.0
      %326 = vmatprep.subr.mxu0 0.0
      %327 = vmatpush2.msra.mxu0 0.0
      %328 = vmatprep.subr.mxu0 0.0
      %329 = vmatpush2.msra.mxu0 0.0
      %330 = vmatprep.subr.mxu0 0.0
      %331 = vmatpush2.msra.mxu0 0.0
      %332 = vmatprep.subr.mxu0 0.0
      %333 = vmatpush2.msra.mxu0 0.0
      %334 = vmatprep.subr.mxu0 0.0
      %335 = vmatpush2.msra.mxu0 %v272
      %336 = vmatprep.subr.mxu0 0.0
      %337 = vmatpush2.msra.mxu0 %v271
      %338 = vmatprep.subr.mxu0 0.0
      %339 = vmatpush2.msra.mxu0 %v270
      %340 = vmatprep.subr.mxu0 0.0
      %341 = vmatpush2.msra.mxu0 %v269
      %342 = vmatprep.subr.mxu0 0.0
      %343 = vmatpush2.msra.mxu0 %v268
      %344 = vmatprep.subr.mxu0 0.0
      %345 = vmatpush2.msra.mxu0 %v267
      %346 = vmatprep.subr.mxu0 0.0
      %347 = vmatpush2.msra.mxu0 %v266
      %348 = vmatprep.subr.mxu0 0.0
      %349 = vmatpush2.msra.mxu0 %v265
      %350 = vmatprep.mubr.f32.mxu0 %v281
      %351 = vmatmul.mubr.f32.gmra.mxu0 %v247
      %v352 = vpop.f32.mrf.mxu0
      %v353 = vadd.f32 %v278, %v352
      %v354 = vpop.f32.mrf.mxu0
      %355 = vmatprep.mubr.f32.mxu0 %v284
      %356 = vmatmul.mubr.f32.gmra.mxu0 %v248
      %v357 = vpop.f32.mrf.mxu0
      %v358 = vadd.f32 %v278, %v357
      %v359 = vpop.f32.mrf.mxu0
      %360 = vdwg.mxu0
      %vm361 = vcmp.ge.f32.partialorder %v353, 0.0
      %vm362 = vcmp.ge.f32.partialorder %v358, 0.0
      %v363 = vmul.f32 %v353, 0.01
      %v364 = vmul.f32 %v358, 0.01
      %v365 = vsel %vm361, %v353, %v363
      %v366 = vsel %vm362, %v358, %v364
      %367 = vst [vmem:[#allocation3] sm:$0x1] 0.0
      %368 = vst [vmem:[#allocation3 + $0x11] sm:$0x1] 0.0
      %369 = vst [vmem:[#allocation3 + $0x1] sm:$0xff] %v365
      %370 = vst [vmem:[#allocation3 + $0x9] sm:$0xff] %v366
      %v371 = vld [vmem:[#allocation3] sm:$0xff]
      %v372 = vld [vmem:[#allocation3 + $0x8] sm:$0xff]
      %v373 = vld [vmem:[#allocation3 + $0x1] sm:$0xff]
      %v374 = vld [vmem:[#allocation3 + $0x9] sm:$0xff]
      %v375 = vld [vmem:[#allocation3 + $0x2] sm:$0xff]
      %v376 = vld [vmem:[#allocation3 + $0xa] sm:$0xff]
      %v377 = vld [vmem:[%s3] sm:$0xff]
      %v378 = vld [vmem:[%s3 + $0x8] sm:$0xff]
      %v379 = vld [vmem:[%s3 + $0x10] sm:$0xff]
      %v380 = vld [vmem:[%s3 + $0x18] sm:$0xff]
      %v381 = vld [vmem:[%s3 + $0x20] sm:$0xff]
      %v382 = vld [vmem:[%s3 + $0x28] sm:$0xff]
      %v383 = vld [vmem:[%s3 + $0x30] sm:$0xff]
      %v384 = vld [vmem:[%s3 + $0x38] sm:$0xff]
      %v385 = vld [vmem:[%s3 + $0x40] sm:$0xff]
      %v386 = vld [vmem:[%s3 + $0x48] sm:$0xff]
      %v387 = vld [vmem:[%s3 + $0x50] sm:$0xff]
      %v388 = vld [vmem:[%s3 + $0x58] sm:$0xff]
      %v389 = vld [vmem:[%s3 + $0x60] sm:$0xff]
      %v390 = vld [vmem:[%s3 + $0x68] sm:$0xff]
      %v391 = vld [vmem:[%s3 + $0x70] sm:$0xff]
      %v392 = vld [vmem:[%s3 + $0x78] sm:$0xff]
      %v393 = vld [vmem:[%s3 + $0x80] sm:$0xff]
      %v394 = vld [vmem:[%s3 + $0x88] sm:$0xff]
      %v395 = vld [vmem:[%s3 + $0x90] sm:$0xff]
      %v396 = vld [vmem:[%s3 + $0x98] sm:$0xff]
      %v397 = vld [vmem:[%s3 + $0xa0] sm:$0xff]
      %v398 = vld [vmem:[%s3 + $0xa8] sm:$0xff]
      %v399 = vld [vmem:[%s3 + $0xb0] sm:$0xff]
      %v400 = vld [vmem:[%s3 + $0xb8] sm:$0xff]
      %v401 = vld [vmem:[%s3 + $0xc0] sm:$0xff]
      %v402 = vld [vmem:[%s3 + $0xc8] sm:$0xff]
      %v403 = vld [vmem:[%s3 + $0xd0] sm:$0xff]
      %v404 = vld [vmem:[%s3 + $0xd8] sm:$0xff]
      %v405 = vld [vmem:[%s3 + $0xe0] sm:$0xff]
      %v406 = vld [vmem:[%s3 + $0xe8] sm:$0xff]
      %v407 = vld [vmem:[%s3 + $0xf0] sm:$0xff]
      %v408 = vld [vmem:[%s3 + $0xf8] sm:$0xff]
      %v409 = vld [vmem:[%s3 + $0x100] sm:$0xff]
      %v410 = vld [vmem:[%s3 + $0x108] sm:$0xff]
      %v411 = vld [vmem:[%s3 + $0x110] sm:$0xff]
      %v412 = vld [vmem:[%s3 + $0x118] sm:$0xff]
      %v413 = vld [vmem:[%s3 + $0x120] sm:$0xff]
      %v414 = vld [vmem:[%s3 + $0x128] sm:$0xff]
      %v415 = vld [vmem:[%s3 + $0x130] sm:$0xff]
      %v416 = vld [vmem:[%s3 + $0x138] sm:$0xff]
      %v417 = vld [vmem:[%s3 + $0x140] sm:$0xff]
      %v418 = vld [vmem:[%s3 + $0x148] sm:$0xff]
      %v419 = vld [vmem:[%s3 + $0x150] sm:$0xff]
      %v420 = vld [vmem:[%s3 + $0x158] sm:$0xff]
      %v421 = vld [vmem:[%s3 + $0x160] sm:$0xff]
      %v422 = vld [vmem:[%s3 + $0x168] sm:$0xff]
      %v423 = vld [vmem:[%s3 + $0x170] sm:$0xff]
      %v424 = vld [vmem:[%s3 + $0x178] sm:$0xff]
      %v425 = vld [vmem:[%s3 + $0x180] sm:$0xff]
      %v426 = vld [vmem:[%s3 + $0x188] sm:$0xff]
      %v427 = vld [vmem:[%s3 + $0x190] sm:$0xff]
      %v428 = vld [vmem:[%s3 + $0x198] sm:$0xff]
      %v429 = vld [vmem:[%s3 + $0x1a0] sm:$0xff]
      %v430 = vld [vmem:[%s3 + $0x1a8] sm:$0xff]
      %v431 = vld [vmem:[%s3 + $0x1b0] sm:$0xff]
      %v432 = vld [vmem:[%s3 + $0x1b8] sm:$0xff]
      %v433 = vld [vmem:[%s3 + $0x1c0] sm:$0xff]
      %v434 = vld [vmem:[%s3 + $0x1c8] sm:$0xff]
      %v435 = vld [vmem:[%s3 + $0x1d0] sm:$0xff]
      %v436 = vld [vmem:[%s3 + $0x1d8] sm:$0xff]
      %v437 = vld [vmem:[%s3 + $0x1e0] sm:$0xff]
      %v438 = vld [vmem:[%s3 + $0x1e8] sm:$0xff]
      %v439 = vld [vmem:[%s3 + $0x1f0] sm:$0xff]
      %v440 = vld [vmem:[%s3 + $0x1f8] sm:$0xff]
      %v441 = vld [vmem:[%s3 + $0x200] sm:$0xff]
      %v442 = vld [vmem:[%s3 + $0x208] sm:$0xff]
      %v443 = vld [vmem:[%s3 + $0x210] sm:$0xff]
      %v444 = vld [vmem:[%s3 + $0x218] sm:$0xff]
      %v445 = vld [vmem:[%s3 + $0x220] sm:$0xff]
      %v446 = vld [vmem:[%s3 + $0x228] sm:$0xff]
      %v447 = vld [vmem:[%s3 + $0x230] sm:$0xff]
      %v448 = vld [vmem:[%s3 + $0x238] sm:$0xff]
      %v449 = vld [vmem:[%s3 + $0x240] sm:$0xff]
      %v450 = vld [vmem:[%s3 + $0x248] sm:$0xff]
      %v451 = vld [vmem:[%s3 + $0x250] sm:$0xff]
      %v452 = vld [vmem:[%s3 + $0x258] sm:$0xff]
      %v453 = vld [vmem:[%s3 + $0x260] sm:$0xff]
      %v454 = vld [vmem:[%s3 + $0x268] sm:$0xff]
      %v455 = vld [vmem:[%s3 + $0x270] sm:$0xff]
      %v456 = vld [vmem:[%s3 + $0x278] sm:$0xff]
      %v457 = vld [vmem:[%s3 + $0x280] sm:$0xff]
      %v458 = vld [vmem:[%s3 + $0x288] sm:$0xff]
      %v459 = vld [vmem:[%s3 + $0x290] sm:$0xff]
      %v460 = vld [vmem:[%s3 + $0x298] sm:$0xff]
      %v461 = vld [vmem:[%s3 + $0x2a0] sm:$0xff]
      %v462 = vld [vmem:[%s3 + $0x2a8] sm:$0xff]
      %v463 = vld [vmem:[%s3 + $0x2b0] sm:$0xff]
      %v464 = vld [vmem:[%s3 + $0x2b8] sm:$0xff]
      %v465 = vld [vmem:[%s3 + $0x2c0] sm:$0xff]
      %v466 = vld [vmem:[%s3 + $0x2c8] sm:$0xff]
      %v467 = vld [vmem:[%s3 + $0x2d0] sm:$0xff]
      %v468 = vld [vmem:[%s3 + $0x2d8] sm:$0xff]
      %v469 = vld [vmem:[%s3 + $0x2e0] sm:$0xff]
      %v470 = vld [vmem:[%s3 + $0x2e8] sm:$0xff]
      %v471 = vld [vmem:[%s3 + $0x2f0] sm:$0xff]
      %v472 = vld [vmem:[%s3 + $0x2f8] sm:$0xff]
      %v473 = vld [vmem:[%s3 + $0x300] sm:$0xff]
      %v474 = vld [vmem:[%s3 + $0x308] sm:$0xff]
      %v475 = vld [vmem:[%s3 + $0x310] sm:$0xff]
      %v476 = vld [vmem:[%s3 + $0x318] sm:$0xff]
      %v477 = vld [vmem:[%s3 + $0x320] sm:$0xff]
      %v478 = vld [vmem:[%s3 + $0x328] sm:$0xff]
      %v479 = vld [vmem:[%s3 + $0x330] sm:$0xff]
      %v480 = vld [vmem:[%s3 + $0x338] sm:$0xff]
      %v481 = vld [vmem:[%s3 + $0x340] sm:$0xff]
      %v482 = vld [vmem:[%s3 + $0x348] sm:$0xff]
      %v483 = vld [vmem:[%s3 + $0x350] sm:$0xff]
      %v484 = vld [vmem:[%s3 + $0x358] sm:$0xff]
      %v485 = vld [vmem:[%s3 + $0x360] sm:$0xff]
      %v486 = vld [vmem:[%s3 + $0x368] sm:$0xff]
      %v487 = vld [vmem:[%s3 + $0x370] sm:$0xff]
      %v488 = vld [vmem:[%s3 + $0x378] sm:$0xff]
      %v489 = vld [vmem:[%s4] sm:$0x3]
      %v491 = vlaneseq
      %v492 = vshrl.u32 %v491, 7
      %v493 = vsub.s32 0, %v492
      %v494 = vrot.slane %v489, %v493
      %v495 = vlaneseq
      %v496 = vshrl.u32 %v495, 7
      %v497 = vsub.s32 1, %v496
      %v498 = vrot.slane %v489, %v497
      %v502 = vsel %vm230, %v225, 0
      %v505 = vsel %vm230, %v226, 0
      %507 = vmatprep.subr.mxu0 %v408
      %508 = vmatpush1.msra.mxu0 %v407
      %509 = vmatprep.subr.mxu0 %v406
      %510 = vmatpush1.msra.mxu0 %v405
      %511 = vmatprep.subr.mxu0 %v404
      %512 = vmatpush1.msra.mxu0 %v403
      %513 = vmatprep.subr.mxu0 %v402
      %514 = vmatpush1.msra.mxu0 %v401
      %515 = vmatprep.subr.mxu0 %v400
      %516 = vmatpush1.msra.mxu0 %v399
      %517 = vmatprep.subr.mxu0 %v398
      %518 = vmatpush1.msra.mxu0 %v397
      %519 = vmatprep.subr.mxu0 %v396
      %520 = vmatpush1.msra.mxu0 %v395
      %521 = vmatprep.subr.mxu0 %v394
      %522 = vmatpush1.msra.mxu0 %v393
      %523 = vmatprep.subr.mxu0 %v392
      %524 = vmatpush1.msra.mxu0 %v391
      %525 = vmatprep.subr.mxu0 %v390
      %526 = vmatpush1.msra.mxu0 %v389
      %527 = vmatprep.subr.mxu0 %v388
      %528 = vmatpush1.msra.mxu0 %v387
      %529 = vmatprep.subr.mxu0 %v386
      %530 = vmatpush1.msra.mxu0 %v385
      %531 = vmatprep.subr.mxu0 %v384
      %532 = vmatpush1.msra.mxu0 %v383
      %533 = vmatprep.subr.mxu0 %v382
      %534 = vmatpush1.msra.mxu0 %v381
      %535 = vmatprep.subr.mxu0 %v380
      %536 = vmatpush1.msra.mxu0 %v379
      %537 = vmatprep.subr.mxu0 %v378
      %538 = vmatpush1.msra.mxu0 %v377
      %539 = vmatprep.subr.mxu0 %v440
      %540 = vmatpush2.msra.mxu0 %v439
      %541 = vmatprep.subr.mxu0 %v438
      %542 = vmatpush2.msra.mxu0 %v437
      %543 = vmatprep.subr.mxu0 %v436
      %544 = vmatpush2.msra.mxu0 %v435
      %545 = vmatprep.subr.mxu0 %v434
      %546 = vmatpush2.msra.mxu0 %v433
      %547 = vmatprep.subr.mxu0 %v432
      %548 = vmatpush2.msra.mxu0 %v431
      %549 = vmatprep.subr.mxu0 %v430
      %550 = vmatpush2.msra.mxu0 %v429
      %551 = vmatprep.subr.mxu0 %v428
      %552 = vmatpush2.msra.mxu0 %v427
      %553 = vmatprep.subr.mxu0 %v426
      %554 = vmatpush2.msra.mxu0 %v425
      %555 = vmatprep.subr.mxu0 %v424
      %556 = vmatpush2.msra.mxu0 %v423
      %557 = vmatprep.subr.mxu0 %v422
      %558 = vmatpush2.msra.mxu0 %v421
      %559 = vmatprep.subr.mxu0 %v420
      %560 = vmatpush2.msra.mxu0 %v419
      %561 = vmatprep.subr.mxu0 %v418
      %562 = vmatpush2.msra.mxu0 %v417
      %563 = vmatprep.subr.mxu0 %v416
      %564 = vmatpush2.msra.mxu0 %v415
      %565 = vmatprep.subr.mxu0 %v414
      %566 = vmatpush2.msra.mxu0 %v413
      %567 = vmatprep.subr.mxu0 %v412
      %568 = vmatpush2.msra.mxu0 %v411
      %569 = vmatprep.subr.mxu0 %v410
      %570 = vmatpush2.msra.mxu0 %v409
      %571 = vmatprep.mubr.f32.mxu0 %v373
      %572 = vmatmul.mubr.f32.gmra.mxu0 %v371
      %v573 = vpop.f32.mrf.mxu0
      %v574 = vadd.f32 %v494, %v573
      %v575 = vpop.f32.mrf.mxu0
      %v576 = vadd.f32 %v498, %v575
      %577 = vmatprep.mubr.f32.mxu0 %v374
      %578 = vmatmul.mubr.f32.gmra.mxu0 %v372
      %v579 = vpop.f32.mrf.mxu0
      %v580 = vadd.f32 %v494, %v579
      %v581 = vpop.f32.mrf.mxu0
      %v582 = vadd.f32 %v498, %v581
      %583 = vdwg.mxu0
      %584 = vmatprep.subr.mxu0 %v472
      %585 = vmatpush1.msra.mxu0 %v471
      %586 = vmatprep.subr.mxu0 %v470
      %587 = vmatpush1.msra.mxu0 %v469
      %588 = vmatprep.subr.mxu0 %v468
      %589 = vmatpush1.msra.mxu0 %v467
      %590 = vmatprep.subr.mxu0 %v466
      %591 = vmatpush1.msra.mxu0 %v465
      %592 = vmatprep.subr.mxu0 %v464
      %593 = vmatpush1.msra.mxu0 %v463
      %594 = vmatprep.subr.mxu0 %v462
      %595 = vmatpush1.msra.mxu0 %v461
      %596 = vmatprep.subr.mxu0 %v460
      %597 = vmatpush1.msra.mxu0 %v459
      %598 = vmatprep.subr.mxu0 %v458
      %599 = vmatpush1.msra.mxu0 %v457
      %600 = vmatprep.subr.mxu0 %v456
      %601 = vmatpush1.msra.mxu0 %v455
      %602 = vmatprep.subr.mxu0 %v454
      %603 = vmatpush1.msra.mxu0 %v453
      %604 = vmatprep.subr.mxu0 %v452
      %605 = vmatpush1.msra.mxu0 %v451
      %606 = vmatprep.subr.mxu0 %v450
      %607 = vmatpush1.msra.mxu0 %v449
      %608 = vmatprep.subr.mxu0 %v448
      %609 = vmatpush1.msra.mxu0 %v447
      %610 = vmatprep.subr.mxu0 %v446
      %611 = vmatpush1.msra.mxu0 %v445
      %612 = vmatprep.subr.mxu0 %v444
      %613 = vmatpush1.msra.mxu0 %v443
      %614 = vmatprep.subr.mxu0 %v442
      %615 = vmatpush1.msra.mxu0 %v441
      %616 = vmatprep.subr.mxu0 0.0
      %617 = vmatpush2.msra.mxu0 0.0
      %618 = vmatprep.subr.mxu0 0.0
      %619 = vmatpush2.msra.mxu0 0.0
      %620 = vmatprep.subr.mxu0 0.0
      %621 = vmatpush2.msra.mxu0 0.0
      %622 = vmatprep.subr.mxu0 0.0
      %623 = vmatpush2.msra.mxu0 0.0
      %624 = vmatprep.subr.mxu0 0.0
      %625 = vmatpush2.msra.mxu0 0.0
      %626 = vmatprep.subr.mxu0 0.0
      %627 = vmatpush2.msra.mxu0 0.0
      %628 = vmatprep.subr.mxu0 0.0
      %629 = vmatpush2.msra.mxu0 0.0
      %630 = vmatprep.subr.mxu0 0.0
      %631 = vmatpush2.msra.mxu0 0.0
      %632 = vmatprep.subr.mxu0 %v488
      %633 = vmatpush2.msra.mxu0 %v487
      %634 = vmatprep.subr.mxu0 %v486
      %635 = vmatpush2.msra.mxu0 %v485
      %636 = vmatprep.subr.mxu0 %v484
      %637 = vmatpush2.msra.mxu0 %v483
      %638 = vmatprep.subr.mxu0 %v482
      %639 = vmatpush2.msra.mxu0 %v481
      %640 = vmatprep.subr.mxu0 %v480
      %641 = vmatpush2.msra.mxu0 %v479
      %642 = vmatprep.subr.mxu0 %v478
      %643 = vmatpush2.msra.mxu0 %v477
      %644 = vmatprep.subr.mxu0 %v476
      %645 = vmatpush2.msra.mxu0 %v475
      %646 = vmatprep.subr.mxu0 %v474
      %647 = vmatpush2.msra.mxu0 %v473
      %648 = vmatprep.mubr.f32.mxu0 %v502
      %649 = vmatmul.mubr.f32.gmra.mxu0 %v375
      %v650 = vpop.f32.mrf.mxu0
      %v651 = vadd.f32 %v574, %v650
      %v652 = vpop.f32.mrf.mxu0
      %v653 = vadd.f32 %v576, %v652
      %654 = vmatprep.mubr.f32.mxu0 %v505
      %655 = vmatmul.mubr.f32.gmra.mxu0 %v376
      %v656 = vpop.f32.mrf.mxu0
      %v657 = vadd.f32 %v580, %v656
      %v658 = vpop.f32.mrf.mxu0
      %v659 = vadd.f32 %v582, %v658
      %660 = vdwg.mxu0
      %vm661 = vcmp.ge.f32.partialorder %v651, 0.0
      %vm662 = vcmp.ge.f32.partialorder %v657, 0.0
      %v663 = vmul.f32 %v651, 0.01
      %v664 = vmul.f32 %v657, 0.01
      %v665 = vsel %vm661, %v651, %v663
      %v666 = vsel %vm662, %v657, %v664
      %v667 = vadd.f32 %v665, %v653
      %v668 = vadd.f32 %v666, %v659
      %669 = vst [vmem:[%s224] sm:$0xff] %v667
      %670 = vst [vmem:[%s224 + $0x8] sm:$0xff] %v668
      %p671 = scmp.lt.s32.totalorder %s16, 1
      %s672 = scalar_select %p671, %s16, 1
      %s673 = smul.addr %s672, 2
      %s674 = smul.addr %s673, 8
      %s675 = scalar_lea.vmem %s5, %s674
      // Predicated region
      $region41: #{conv_block_forward.1} parent=39 // pred_check
        %p676 = pneg %p144
      $region42: #{conv_block_forward.1} parent=39 // pred_check_branch
        %678 = sbr.rel (%p676) target = $region44
      $region43: #{conv_block_forward.1} parent=39 // pred_region
        _
      $region44: #{conv_block_forward.1} parent=39 // pred_fallthru
        _
    $region40: #{conv_block_forward.1} parent=5 // pred_fallthru
      _
    %p679 = scmp.le.s32.totalorder 2, %s11
    // Predicated region
    $region45: #{conv_block_forward.1} parent=5 // pred_check
      %p680 = pneg %p679
    $region46: #{conv_block_forward.1} parent=5 // pred_check_branch
      %682 = sbr.rel (%p680) target = $region48
    $region47: #{conv_block_forward.1} parent=5 // pred_region
      %s683 = ssub.s32 %s11, 2
      // Predicated region
      $region49: #{conv_block_forward.1} parent=47 // pred_check
        %p684 = pneg %p150
      $region50: #{conv_block_forward.1} parent=47 // pred_check_branch
        %686 = sbr.rel (%p684) target = $region52
      $region51: #{conv_block_forward.1} parent=47 // pred_region
        %p687 = scmp.lt.s32.totalorder %s17, 1
        %s688 = scalar_select %p687, %s17, 1
        %s689 = smul.addr %s688, 2
        %s690 = smul.addr %s689, 8
        %s691 = scalar_lea.vmem %s5, %s690
      $region52: #{conv_block_forward.1} parent=47 // pred_fallthru
        _
    $region48: #{conv_block_forward.1} parent=5 // pred_fallthru
      _
  $region6: #{conv_block_forward.1} parent=0 // loop_footer
    %s15 = sadd.s32 1, %s11
  $region7: #{conv_block_forward.1} parent=0 // loop_footer_branch
    %10 = sbr.rel target = $region3
  $region8: #{conv_block_forward.1} parent=0 // loop_exit
    _

</llo_original>
